<compile_context>
chip_gen: v5e
topology: v5e:2x2
jax: 0.10.0
libtpu: 0.0.40
codegen_flags: <defaults>
</compile_context>

<pallas_src>
import jax
import jax.numpy as jnp
from jax.experimental import pallas as pl
from jax.experimental.pallas import tpu as pltpu


def _max_pool_kernel(x_ref, o_ref):
    j = pl.program_id(1)                                      # reduction step
    tile_max = jnp.max(x_ref[...], axis=-1, keepdims=True)    # (tm, 1)

    @pl.when(j == 0)
    def _init():
        o_ref[...] = tile_max

    @pl.when(j > 0)
    def _accum():
        o_ref[...] = jnp.maximum(o_ref[...], tile_max)


def _pick_block(dim, unit, preferred):
    """Largest block <= preferred that is a multiple of `unit` and divides `dim`.

    Falls back to the full dim (always a legal block shape) when `dim` is small
    or has no suitable divisor.
    # TODO(synk): for huge dims that are not multiples of `unit`, pad with the
    # dtype minimum instead of falling back to a single full-dim block.
    """
    if dim <= preferred:
        return dim
    if dim % unit != 0:
        return dim
    best = unit
    b = unit
    while b <= preferred:
        if dim % b == 0:
            best = b
        b += unit
    return best


def fast_adaptive_max_pool(x, *, flatten=False, input_fmt="NCHW"):
    """Pallas TPU implementation of FastAdaptiveMaxPool.forward."""
    if input_fmt == "NHWC":
        # Layout plumbing only: bring channels next to batch so the kernel
        # always reduces over the trailing (lane-mapped) spatial axis.
        x = jnp.moveaxis(x, -1, 1)
    elif input_fmt != "NCHW":
        raise ValueError(f"unsupported input_fmt: {input_fmt}")

    B, C, H, W = x.shape
    M, N = B * C, H * W
    x2 = x.reshape(M, N)

    tm = _pick_block(M, 8, 256)      # sublane axis: multiples of 8 (or full)
    tn = _pick_block(N, 128, 2048)   # lane axis:    multiples of 128 (or full)

    out = pl.pallas_call(
        _max_pool_kernel,
        out_shape=jax.ShapeDtypeStruct((M, 1), x.dtype),
        grid_spec=pltpu.PrefetchScalarGridSpec(
            num_scalar_prefetch=0,
            grid=(M // tm, N // tn),                      # reduction axis last
            in_specs=[pl.BlockSpec((tm, tn), lambda i, j: (i, j))],
            out_specs=pl.BlockSpec((tm, 1), lambda i, j: (i, 0)),
        ),
        compiler_params=pltpu.CompilerParams(
            dimension_semantics=("parallel", "arbitrary")),
    )(x2)

    if flatten:
        return out.reshape(B, C)
    if input_fmt == "NHWC":
        return out.reshape(B, 1, 1, C)
    return out.reshape(B, C, 1, 1)


if __name__ == "__main__":
    B, C, H, W = 2, 4, 16, 16
    key = jax.random.PRNGKey(0)
    x = jax.random.normal(key, (B, C, H, W), dtype=jnp.float32)

    # Default module config: flatten=False, input_fmt='NCHW' -> keepdim output.
    out = fast_adaptive_max_pool(x, flatten=False, input_fmt="NCHW")
    out = jax.block_until_ready(out)

    ref = jnp.max(x, axis=(2, 3), keepdims=True)
    assert out.shape == (B, C, 1, 1)
    assert jnp.array_equal(out, ref)

    # flatten=True path (keepdim=False in the reference).
    out_flat = jax.block_until_ready(fast_adaptive_max_pool(x, flatten=True))
    assert out_flat.shape == (B, C)
    assert jnp.array_equal(out_flat, jnp.max(x, axis=(2, 3)))

    print("KERNEL_OK")
</pallas_src>

<mosaic_0001>
module attributes {stable_mosaic.version = 11 : i64} {
  func.func @_max_pool_kernel(%arg0: i32, %arg1: i32, %arg2: memref<8x256xf32, #tpu.memory_space<vmem>>, %arg3: memref<8x1xf32, #tpu.memory_space<vmem>>) attributes {dimension_semantics = [#tpu.dimension_semantics<parallel>, #tpu.dimension_semantics<arbitrary>], iteration_bounds = array<i64: 1, 1>, scalar_prefetch = 0 : i64, scratch_operands = 0 : i64, tpu.core_type = #tpu.core_type<tc>, window_params = [{transform_indices = @transform_0, window_bounds = array<i64: 8, 256>}, {transform_indices = @transform_1, window_bounds = array<i64: 8, 1>}]} {
    %c0 = arith.constant 0 : index
    %c0_0 = arith.constant 0 : index
    %0 = vector.load %arg2[%c0, %c0_0] : memref<8x256xf32, #tpu.memory_space<vmem>>, vector<8x256xf32>
    %cst = arith.constant dense<0xFF800000> : vector<8xf32>
    %1 = vector.multi_reduction <maximumf>, %0, %cst [1] : vector<8x256xf32> to vector<8xf32>
    %2 = vector.shape_cast %1 : vector<8xf32> to vector<8x1xf32>
    %c0_i32 = arith.constant 0 : i32
    %3 = arith.cmpi eq, %arg1, %c0_i32 : i32
    %4 = arith.extui %3 : i1 to i32
    %c0_i32_1 = arith.constant 0 : i32
    %5 = arith.cmpi ne, %4, %c0_i32_1 : i32
    scf.if %5 {
      %c0_4 = arith.constant 0 : index
      %c0_5 = arith.constant 0 : index
      %9 = vector.load %arg3[%c0_4, %c0_5] : memref<8x1xf32, #tpu.memory_space<vmem>>, vector<8x1xf32>
      tpu.vector_store %arg3[%c0_4, %c0_5], %2 {strides = array<i32>} : memref<8x1xf32, #tpu.memory_space<vmem>>, vector<8x1xf32>,
    } else {
    }
    %c0_i32_2 = arith.constant 0 : i32
    %6 = arith.cmpi sgt, %arg1, %c0_i32_2 : i32
    %7 = arith.extui %6 : i1 to i32
    %c0_i32_3 = arith.constant 0 : i32
    %8 = arith.cmpi ne, %7, %c0_i32_3 : i32
    scf.if %8 {
      %c0_4 = arith.constant 0 : index
      %c0_5 = arith.constant 0 : index
      %9 = vector.load %arg3[%c0_4, %c0_5] : memref<8x1xf32, #tpu.memory_space<vmem>>, vector<8x1xf32>
      %10 = arith.maximumf %9, %2 : vector<8x1xf32>
      %c0_6 = arith.constant 0 : index
      %c0_7 = arith.constant 0 : index
      %11 = vector.load %arg3[%c0_6, %c0_7] : memref<8x1xf32, #tpu.memory_space<vmem>>, vector<8x1xf32>
      tpu.vector_store %arg3[%c0_6, %c0_7], %10 {strides = array<i32>} : memref<8x1xf32, #tpu.memory_space<vmem>>, vector<8x1xf32>,
    } else {
    }
    return
  }
  func.func @transform_0(%arg0: i32, %arg1: i32) -> (i32, i32) {
    %c0_i32 = arith.constant 0 : i32
    return %arg0, %arg1 : i32, i32
  }
  func.func @transform_1(%arg0: i32, %arg1: i32) -> (i32, i32) {
    %c0_i32 = arith.constant 0 : i32
    %c0_i32_0 = arith.constant 0 : i32
    return %arg0, %c0_i32 : i32, i32
  }
}

</mosaic_0001>

<llo_original>
// kernel: tpu_custom_call.1
$region0: #{tpu_custom_call.1}
  #allocation0 [shape = 'u32[]', space=smem, size = 0x4, offset = 0x4, fixed_abs, tag = 'smem constant byte address 0x4 - core index']
  #allocation1 [shape = 'u32[72,128]{1,0:T(1,128)}', space=vmem, size = 0x9000, scoped, tag = 'internal scratch']
  %s0 = inlined_call_operand.hbm [shape: f32[8,256], index: 0, kind: input, shape index: {}]
  %s1 = inlined_call_operand.vmem [shape: f32[8,1], index: 1, kind: output, shape index: {}]
  %s2 = sld [smem:[#allocation0]]
  $region26: #{tpu_custom_call.1} parent=0
    _
  %s4 = ssub.s32 1, %s2
  %s5 = scalar_select 0, %s4, %s2
  $region1: #{tpu_custom_call.1} parent=0
    #allocation2 [shape = 'u8[8192]{0}', space=vmem, size = 0x2000, scoped, tag = 'input window, operand 0, single buffered']
    #allocation3 [shape = 's32[1]{0}', space=sflag, size = 0x4, scoped, tag = 'scoped memory for tpu_custom_call.1']
    %6 = vsyncpa [#allocation3], 0
    // Predicated region
    $region2: #{tpu_custom_call.1} parent=1 // pred_check
      _
    $region3: #{tpu_custom_call.1} parent=1 // pred_check_branch
      %8 = sbr.rel (0) target = $region5
    $region4: #{tpu_custom_call.1} parent=1 // pred_region
      %10 = vsyncadd [#allocation3], 0
      %s12 = sshll.u32 %s0, 4
      %s13 = int_to_ptr.hbm [resolvable:$true] %s12
      %s14 = sshll.u32 [#allocation2], 4
      %s15 = int_to_ptr.vmem [resolvable:$true] %s14
      %17 = dma.hbm_to_vmem [thread:$0]  %s13, 256, %s15, [#allocation3]
    $region5: #{tpu_custom_call.1} parent=1 // pred_fallthru
      _
    // Predicated region
    $region6: #{tpu_custom_call.1} parent=1 // pred_check
      _
    $region7: #{tpu_custom_call.1} parent=1 // pred_check_branch
      %19 = sbr.rel (0) target = $region9
    $region8: #{tpu_custom_call.1} parent=1 // pred_region
      %21 = dma.done [#allocation3], 256
    $region9: #{tpu_custom_call.1} parent=1 // pred_fallthru
      _
    %v22 = vld [vmem:[#allocation2] sm:$0xff]
    %v23 = vld [vmem:[#allocation2 + $0x8] sm:$0xff]
    %v24 = vmax.f32 %v22, %v23
    %25 = vmax.xlane.f32.xlu0 %v24
    %v26 = vpop.xlane.xlu0 %25
    %p27 = scmp.eq.s32.totalorder 0, 0
    // Predicated region
    $region10: #{tpu_custom_call.1} parent=1 // pred_check
      %p28 = pneg %p27
    $region11: #{tpu_custom_call.1} parent=1 // pred_check_branch
      %30 = sbr.rel (%p28) target = $region13
    $region12: #{tpu_custom_call.1} parent=1 // pred_region
      %vm31 = vcmask 7168
      %32 = vst.msk [vmem:[%s1] sm:$0xff] %vm31, %v26
    $region13: #{tpu_custom_call.1} parent=1 // pred_fallthru
      _
    %p33 = scmp.gt.s32.totalorder 0, 0
    // Predicated region
    $region14: #{tpu_custom_call.1} parent=1 // pred_check
      %p34 = pneg %p33
    $region15: #{tpu_custom_call.1} parent=1 // pred_check_branch
      %36 = sbr.rel (%p34) target = $region17
    $region16: #{tpu_custom_call.1} parent=1 // pred_region
      %v37 = vld [vmem:[%s1] sm:$0xff]
      %v38 = vmax.f32 %v37, %v26
      %vm39 = vcmask 7168
      %40 = vst.msk [vmem:[%s1] sm:$0xff] %vm39, %v38
    $region17: #{tpu_custom_call.1} parent=1 // pred_fallthru
      _
    // Predicated region
    $region18: #{tpu_custom_call.1} parent=1 // pred_check
      _
    $region19: #{tpu_custom_call.1} parent=1 // pred_check_branch
      %42 = sbr.rel (0) target = $region21
    $region20: #{tpu_custom_call.1} parent=1 // pred_region
      _
    $region21: #{tpu_custom_call.1} parent=1 // pred_fallthru
      _
    // Predicated region
    $region22: #{tpu_custom_call.1} parent=1 // pred_check
      _
    $region23: #{tpu_custom_call.1} parent=1 // pred_check_branch
      %44 = sbr.rel (0) target = $region25
    $region24: #{tpu_custom_call.1} parent=1 // pred_region
      _
    $region25: #{tpu_custom_call.1} parent=1 // pred_fallthru
      _
    %45 = vsyncpa [#allocation3], 1

</llo_original>
